<compile_context>
chip_gen: v5e
topology: v5e:2x2
jax: 0.10.0
libtpu: 0.0.40
codegen_flags: <defaults>
</compile_context>

<pallas_src>
import math

import numpy as np
import jax
import jax.numpy as jnp
from jax.experimental import pallas as pl
from jax.experimental.pallas import tpu as pltpu

_LANE = 128
_SUBLANE = 8


def _round_up(x, m):
    return ((x + m - 1) // m) * m


# ----------------------------------------------------------------------------
# Deterministic parameter init (mirrors ng_init from the PyTorch module).
# ----------------------------------------------------------------------------
def ng_init(s1, s2, rng, bias=True):
    if bias:
        s1 = s1 + 1
    flat = rng.random(s1 * s2) * 2.0 - 1.0
    weights = flat.reshape([s1, s2])
    weights[-1, :] *= np.sqrt(s1)
    return weights.astype(np.float32)


# ----------------------------------------------------------------------------
# Pallas kernel: fused 3-layer MLP (matmul + bias + ReLU hot path).
# Scales are pre-folded into weights/biases; padding lanes are zero.
# ----------------------------------------------------------------------------
def _jlnet_mlp_kernel(x_ref, w1_ref, b1_ref, w2_ref, b2_ref, w3_ref, b3_ref,
                      o_ref):
    op_dtype = w1_ref.dtype  # MXU operand dtype (bf16 default, f32 exact path)

    # In-kernel cast of the input tile (free VPU work under the x DMA);
    # x is read from HBM as f32, no wrapper-side cast pass.
    x = x_ref[...].astype(op_dtype)

    # Layer 0: ReLU(x @ W1 + b1)   (1/sqrt(in_dim) folded into W1/b1)
    h = jnp.dot(x, w1_ref[...], preferred_element_type=jnp.float32)
    h = jnp.maximum(h + b1_ref[...], 0.0)

    # Layer 1: ReLU(h @ W2 + b2)
    h = jnp.dot(h.astype(op_dtype), w2_ref[...],
                preferred_element_type=jnp.float32)
    h = jnp.maximum(h + b2_ref[...], 0.0)

    # Layer 2 ("last"): h @ W3 + b3, no activation.
    h = jnp.dot(h.astype(op_dtype), w3_ref[...],
                preferred_element_type=jnp.float32)
    h = h + b3_ref[...]                       # (tm, out_p) f32

    # Transposed, lane-dense writeback: (out_p, tm) via XLU (hidden under DMA),
    # then store only the real logit rows -> o_ref block is (out_dim, tm).
    ht = jnp.transpose(h)
    o_ref[...] = ht[:o_ref.shape[0], :].astype(o_ref.dtype)


# ----------------------------------------------------------------------------
# One-time parameter prep: split bias row, fold 1/sqrt scale, zero-pad the
# output (lane) dims to multiples of 128, cast MXU operands to compute dtype.
# Layer-0 rows are left at in_dim so x needs NO wrapper-side padding.
# ----------------------------------------------------------------------------
def prepare_params(w_full_list, compute_dtype=jnp.bfloat16):
    """w_full_list: list of ng_init matrices, each (in_features+1, out_features)."""
    prepped = []
    for idx, W in enumerate(w_full_list):
        W = np.asarray(W, np.float32)
        in_f = W.shape[0] - 1
        out_f = W.shape[1]
        s = 1.0 / math.sqrt(in_f)          # JlLinear divides by sqrt(in_features)
        w = W[:-1] * s                     # fold the static scale (offline prep)
        b = W[-1:] * s
        # Contraction (row) dim: layer 0 matches the raw flattened input width;
        # deeper layers match the previous layer's 128-padded output width.
        rows = in_f if idx == 0 else _round_up(in_f, _LANE)
        out_p = _round_up(out_f, _LANE)
        w_p = np.zeros((rows, out_p), np.float32)
        w_p[:in_f, :out_f] = w
        b_p = np.zeros((1, out_p), np.float32)
        b_p[:, :out_f] = b
        prepped.append({
            "w": jnp.asarray(w_p, compute_dtype),  # MXU operand dtype
            "b": jnp.asarray(b_p, jnp.float32),    # epilogue stays f32 (v5e-safe)
            "in_features": in_f,
            "out_features": out_f,
        })
    return prepped


# ----------------------------------------------------------------------------
# Wrapper: batch-tiled, lane-dense pallas_call (output emitted as (out_dim, N)).
# ----------------------------------------------------------------------------
def jlnet_forward(x_nchw, params, *, tm=2048, vmem_limit_bytes=32 * 1024 * 1024):
    """JlNet forward on TPU.  x_nchw: [N, C, H, W] float32; params from prepare_params."""
    N = x_nchw.shape[0]
    in_dim = int(np.prod(x_nchw.shape[1:]))
    assert in_dim == params[0]["in_features"]
    # Layer-to-layer padded-shape consistency (review correctness concern #3).
    assert params[0]["w"].shape[1] == params[1]["w"].shape[0]
    assert params[1]["w"].shape[1] == params[2]["w"].shape[0]

    out_dim = params[2]["out_features"]

    # x.view(-1, in_dim) exactly like the module.  No wrapper-side pad/cast:
    # the contraction dim is the full array dim and the dtype cast is in-kernel.
    x = x_nchw.reshape(N, in_dim)

    # Batch tile: always a multiple of 128 (lane dim of the transposed output
    # block -> unmasked stores; blocks larger than N are masked automatically).
    # For large batches, split so the grid has >=2 steps (v7x megacore).
    tm_max = max(_LANE, _round_up(tm, _LANE))
    if N >= 1024:
        tm_eff = min(tm_max, _round_up(pl.cdiv(N, 2), _LANE))
    else:
        tm_eff = min(tm_max, _round_up(N, _LANE))
    grid = (pl.cdiv(N, tm_eff),)

    w1, b1 = params[0]["w"], params[0]["b"]
    w2, b2 = params[1]["w"], params[1]["b"]
    w3, b3 = params[2]["w"], params[2]["b"]

    def _resident(arr):
        # Whole (2-D) array as one block; constant index_map -> stays resident
        # in VMEM across the batch grid (no re-DMA).
        return pl.BlockSpec(arr.shape, lambda i: (0, 0))

    w_itemsize = jnp.dtype(w1.dtype).itemsize
    cost = pl.CostEstimate(
        flops=2 * N * (in_dim * w1.shape[1]
                       + w2.shape[0] * w2.shape[1]
                       + w3.shape[0] * w3.shape[1]),
        transcendentals=0,
        bytes_accessed=(N * in_dim * x.dtype.itemsize
                        + sum(int(np.prod(p["w"].shape)) for p in params) * w_itemsize
                        + sum(int(np.prod(p["b"].shape)) for p in params) * 4
                        + N * out_dim * 4),
    )

    out_t = pl.pallas_call(
        _jlnet_mlp_kernel,
        out_shape=jax.ShapeDtypeStruct((out_dim, N), jnp.float32),
        grid=grid,
        in_specs=[
            pl.BlockSpec((tm_eff, in_dim), lambda i: (i, 0)),   # x: tiled over batch
            _resident(w1), _resident(b1),
            _resident(w2), _resident(b2),
            _resident(w3), _resident(b3),
        ],
        out_specs=pl.BlockSpec((out_dim, tm_eff), lambda i: (0, i)),
        compiler_params=pltpu.CompilerParams(
            dimension_semantics=("parallel",),
            vmem_limit_bytes=vmem_limit_bytes,
        ),
        cost_estimate=cost,
    )(x, w1, b1, w2, b2, w3, b3)

    # Tiny (out_dim, N) -> (N, out_dim) transpose (40 B/row); replaces the old
    # full-HBM-pass slice over a 128-lane padded output.
    return out_t.T


# ----------------------------------------------------------------------------
# Pure-JAX reference: literal transcription of the PyTorch forward
# (concat ones, full W incl. bias row, divide by sqrt(in_features)).
# ----------------------------------------------------------------------------
def jlnet_forward_ref(x_nchw, w_full_list):
    N = x_nchw.shape[0]
    h = x_nchw.reshape(N, -1)
    n = len(w_full_list)
    for i, W in enumerate(w_full_list):
        in_f = W.shape[0] - 1
        ones = jnp.ones((h.shape[0], 1), h.dtype)
        h = jnp.concatenate([h, ones], axis=1) @ jnp.asarray(W) / math.sqrt(in_f)
        if i < n - 1:
            h = jnp.maximum(h, 0.0)
    return h


# TODO(synk): JlngAddmm.backward JL/K-FAC projection machinery (A/B stats,
# Cholesky-solve preconditioning) is training-time autograd bookkeeping with
# no forward-pass Pallas equivalent; intentionally not implemented here.

if __name__ == "__main__":
    # Small shapes consistent with the module: out_dim=10, in_channel=1,
    # img_sz=16 -> in_dim=256, hidden_dim=32, batch=2.
    batch, in_channel, img_sz = 2, 1, 16
    hidden_dim, out_dim = 32, 10
    in_dim = in_channel * img_sz * img_sz

    # Deterministic weights (ng_init semantics) with a fixed numpy seed.
    rng = np.random.RandomState(0)
    w_full = [
        ng_init(in_dim, hidden_dim, rng),      # (in_dim+1, hidden)
        ng_init(hidden_dim, hidden_dim, rng),  # (hidden+1, hidden)
        ng_init(hidden_dim, out_dim, rng),     # (hidden+1, out)
    ]

    # Deterministic input.
    key = jax.random.PRNGKey(0)
    x = jax.random.normal(key, (batch, in_channel, img_sz, img_sz), jnp.float32)

    ref = jax.block_until_ready(jlnet_forward_ref(x, w_full))

    # f32 MXU operands: exact module semantics.
    params_f32 = prepare_params(w_full, compute_dtype=jnp.float32)
    out_f32 = jax.block_until_ready(jlnet_forward(x, params_f32))
    assert out_f32.shape == (batch, out_dim)
    np.testing.assert_allclose(np.asarray(out_f32), np.asarray(ref),
                               rtol=1e-5, atol=1e-5)

    # bf16 MXU operands (default; MXU-native on v5e/v6e/v7x), f32 accumulation
    # + f32 epilogue; x stays f32 in HBM and is quantized in-kernel.
    params_bf16 = prepare_params(w_full)
    out_bf16 = jax.block_until_ready(jlnet_forward(x, params_bf16))
    assert out_bf16.shape == (batch, out_dim)
    np.testing.assert_allclose(np.asarray(out_bf16), np.asarray(ref),
                               rtol=5e-2, atol=5e-2)

    print("KERNEL_OK")
</pallas_src>

<mosaic_0001>
module attributes {stable_mosaic.version = 11 : i64} {
  func.func @_jlnet_mlp_kernel(%arg0: i32, %arg1: memref<128x256xf32, #tpu.memory_space<vmem>>, %arg2: memref<256x128xf32, #tpu.memory_space<vmem>>, %arg3: memref<1x128xf32, #tpu.memory_space<vmem>>, %arg4: memref<128x128xf32, #tpu.memory_space<vmem>>, %arg5: memref<1x128xf32, #tpu.memory_space<vmem>>, %arg6: memref<128x128xf32, #tpu.memory_space<vmem>>, %arg7: memref<1x128xf32, #tpu.memory_space<vmem>>, %arg8: memref<10x128xf32, #tpu.memory_space<vmem>>) attributes {dimension_semantics = [#tpu.dimension_semantics<parallel>], iteration_bounds = array<i64: 1>, scalar_prefetch = 0 : i64, scratch_operands = 0 : i64, tpu.core_type = #tpu.core_type<tc>, window_params = [{transform_indices = @transform_0, window_bounds = array<i64: 128, 256>}, {pipeline_mode = #tpu.pipeline_mode<synchronous>, transform_indices = @transform_1, window_bounds = array<i64: 256, 128>}, {pipeline_mode = #tpu.pipeline_mode<synchronous>, transform_indices = @transform_2, window_bounds = array<i64: 1, 128>}, {pipeline_mode = #tpu.pipeline_mode<synchronous>, transform_indices = @transform_3, window_bounds = array<i64: 128, 128>}, {pipeline_mode = #tpu.pipeline_mode<synchronous>, transform_indices = @transform_4, window_bounds = array<i64: 1, 128>}, {pipeline_mode = #tpu.pipeline_mode<synchronous>, transform_indices = @transform_5, window_bounds = array<i64: 128, 128>}, {pipeline_mode = #tpu.pipeline_mode<synchronous>, transform_indices = @transform_6, window_bounds = array<i64: 1, 128>}, {transform_indices = @transform_7, window_bounds = array<i64: 10, 128>}]} {
    %c0 = arith.constant 0 : index
    %c0_0 = arith.constant 0 : index
    %0 = vector.load %arg1[%c0, %c0_0] : memref<128x256xf32, #tpu.memory_space<vmem>>, vector<128x256xf32>
    %c0_1 = arith.constant 0 : index
    %c0_2 = arith.constant 0 : index
    %1 = vector.load %arg2[%c0_1, %c0_2] : memref<256x128xf32, #tpu.memory_space<vmem>>, vector<256x128xf32>
    %cst = arith.constant dense<0.000000e+00> : vector<128x128xf32>
    %2 = tpu.matmul %0, %1, %cst {dimension_numbers = #tpu.dot_dimension_numbers<[1], [0], [0], [1], [0, 0, 1, 1], [], []>} : vector<128x256xf32>, vector<256x128xf32>, vector<128x128xf32> -> vector<128x128xf32>
    %c0_3 = arith.constant 0 : index
    %c0_4 = arith.constant 0 : index
    %3 = vector.load %arg3[%c0_3, %c0_4] : memref<1x128xf32, #tpu.memory_space<vmem>>, vector<1x128xf32>
    %4 = vector.broadcast %3 : vector<1x128xf32> to vector<128x128xf32>
    %5 = arith.addf %2, %4 : vector<128x128xf32>
    %cst_5 = arith.constant 0.000000e+00 : f32
    %6 = vector.broadcast %cst_5 : f32 to vector<128x128xf32>
    %7 = arith.maximumf %5, %6 : vector<128x128xf32>
    %c0_6 = arith.constant 0 : index
    %c0_7 = arith.constant 0 : index
    %8 = vector.load %arg4[%c0_6, %c0_7] : memref<128x128xf32, #tpu.memory_space<vmem>>, vector<128x128xf32>
    %cst_8 = arith.constant dense<0.000000e+00> : vector<128x128xf32>
    %9 = tpu.matmul %7, %8, %cst_8 {dimension_numbers = #tpu.dot_dimension_numbers<[1], [0], [0], [1], [0, 0, 1, 1], [], []>} : vector<128x128xf32>, vector<128x128xf32>, vector<128x128xf32> -> vector<128x128xf32>
    %c0_9 = arith.constant 0 : index
    %c0_10 = arith.constant 0 : index
    %10 = vector.load %arg5[%c0_9, %c0_10] : memref<1x128xf32, #tpu.memory_space<vmem>>, vector<1x128xf32>
    %11 = vector.broadcast %10 : vector<1x128xf32> to vector<128x128xf32>
    %12 = arith.addf %9, %11 : vector<128x128xf32>
    %cst_11 = arith.constant 0.000000e+00 : f32
    %13 = vector.broadcast %cst_11 : f32 to vector<128x128xf32>
    %14 = arith.maximumf %12, %13 : vector<128x128xf32>
    %c0_12 = arith.constant 0 : index
    %c0_13 = arith.constant 0 : index
    %15 = vector.load %arg6[%c0_12, %c0_13] : memref<128x128xf32, #tpu.memory_space<vmem>>, vector<128x128xf32>
    %cst_14 = arith.constant dense<0.000000e+00> : vector<128x128xf32>
    %16 = tpu.matmul %14, %15, %cst_14 {dimension_numbers = #tpu.dot_dimension_numbers<[1], [0], [0], [1], [0, 0, 1, 1], [], []>} : vector<128x128xf32>, vector<128x128xf32>, vector<128x128xf32> -> vector<128x128xf32>
    %c0_15 = arith.constant 0 : index
    %c0_16 = arith.constant 0 : index
    %17 = vector.load %arg7[%c0_15, %c0_16] : memref<1x128xf32, #tpu.memory_space<vmem>>, vector<1x128xf32>
    %18 = vector.broadcast %17 : vector<1x128xf32> to vector<128x128xf32>
    %19 = arith.addf %16, %18 : vector<128x128xf32>
    %20 = tpu.transpose %19, [1, 0] : vector<128x128xf32> -> vector<128x128xf32>
    %21 = vector.extract_strided_slice %20 {offsets = [0, 0], sizes = [10, 128], strides = [1, 1]} : vector<128x128xf32> to vector<10x128xf32>
    %c0_17 = arith.constant 0 : index
    %c0_18 = arith.constant 0 : index
    %22 = vector.load %arg8[%c0_17, %c0_18] : memref<10x128xf32, #tpu.memory_space<vmem>>, vector<10x128xf32>
    tpu.vector_store %arg8[%c0_17, %c0_18], %21 {strides = array<i32>} : memref<10x128xf32, #tpu.memory_space<vmem>>, vector<10x128xf32>,
    return
  }
  func.func @transform_0(%arg0: i32) -> (i32, i32) {
    %c0_i32 = arith.constant 0 : i32
    %c0_i32_0 = arith.constant 0 : i32
    return %arg0, %c0_i32 : i32, i32
  }
  func.func @transform_1(%arg0: i32) -> (i32, i32) {
    %c0_i32 = arith.constant 0 : i32
    %c0_i32_0 = arith.constant 0 : i32
    %c0_i32_1 = arith.constant 0 : i32
    return %c0_i32, %c0_i32_0 : i32, i32
  }
  func.func @transform_2(%arg0: i32) -> (i32, i32) {
    %c0_i32 = arith.constant 0 : i32
    %c0_i32_0 = arith.constant 0 : i32
    %c0_i32_1 = arith.constant 0 : i32
    return %c0_i32, %c0_i32_0 : i32, i32
  }
  func.func @transform_3(%arg0: i32) -> (i32, i32) {
    %c0_i32 = arith.constant 0 : i32
    %c0_i32_0 = arith.constant 0 : i32
    %c0_i32_1 = arith.constant 0 : i32
    return %c0_i32, %c0_i32_0 : i32, i32
  }
  func.func @transform_4(%arg0: i32) -> (i32, i32) {
    %c0_i32 = arith.constant 0 : i32
    %c0_i32_0 = arith.constant 0 : i32
    %c0_i32_1 = arith.constant 0 : i32
    return %c0_i32, %c0_i32_0 : i32, i32
  }
  func.func @transform_5(%arg0: i32) -> (i32, i32) {
    %c0_i32 = arith.constant 0 : i32
    %c0_i32_0 = arith.constant 0 : i32
    %c0_i32_1 = arith.constant 0 : i32
    return %c0_i32, %c0_i32_0 : i32, i32
  }
  func.func @transform_6(%arg0: i32) -> (i32, i32) {
    %c0_i32 = arith.constant 0 : i32
    %c0_i32_0 = arith.constant 0 : i32
    %c0_i32_1 = arith.constant 0 : i32
    return %c0_i32, %c0_i32_0 : i32, i32
  }
  func.func @transform_7(%arg0: i32) -> (i32, i32) {
    %c0_i32 = arith.constant 0 : i32
    %c0_i32_0 = arith.constant 0 : i32
    return %c0_i32, %arg0 : i32, i32
  }
}

</mosaic_0001>

<llo_original>
// kernel: tpu_custom_call.1
$region0: #{tpu_custom_call.1}
  #allocation0 [shape = 'u32[]', space=smem, size = 0x4, offset = 0x4, fixed_abs, tag = 'smem constant byte address 0x4 - core index']
  #allocation1 [shape = 'u32[72,128]{1,0:T(1,128)}', space=vmem, size = 0x9000, scoped, tag = 'internal scratch']
  %s0 = inlined_call_operand.hbm [shape: f32[2,256], index: 0, kind: input, shape index: {}]
  %s1 = inlined_call_operand.hbm [shape: f32[256,128], index: 1, kind: input, shape index: {}]
  %s2 = inlined_call_operand.vmem [shape: f32[1,128], index: 2, kind: input, shape index: {}]
  %s3 = inlined_call_operand.hbm [shape: f32[128,128], index: 3, kind: input, shape index: {}]
  %s4 = inlined_call_operand.vmem [shape: f32[1,128], index: 4, kind: input, shape index: {}]
  %s5 = inlined_call_operand.hbm [shape: f32[128,128], index: 5, kind: input, shape index: {}]
  %s6 = inlined_call_operand.vmem [shape: f32[1,128], index: 6, kind: input, shape index: {}]
  %s7 = inlined_call_operand.vmem [shape: f32[10,2], index: 7, kind: output, shape index: {}]
  %s8 = sld [smem:[#allocation0]]
  $region54: #{tpu_custom_call.1} parent=0
    _
  %s10 = ssub.s32 1, %s8
  %s11 = scalar_select 0, %s10, %s8
  $region1: #{tpu_custom_call.1} parent=0
    #allocation2 [shape = 'u8[131072]{0}', space=vmem, size = 0x20000, scoped, tag = 'input window, operand 0, single buffered']
    #allocation3 [shape = 's32[1]{0}', space=sflag, size = 0x4, scoped, tag = 'scoped memory for tpu_custom_call.1']
    #allocation4 [shape = 'u8[131072]{0}', space=vmem, size = 0x20000, scoped, tag = 'input window, operand 1, single buffered']
    #allocation5 [shape = 's32[1]{0}', space=sflag, size = 0x4, scoped, tag = 'scoped memory for tpu_custom_call.1']
    #allocation6 [shape = 'u8[65536]{0}', space=vmem, size = 0x10000, scoped, tag = 'input window, operand 3, single buffered']
    #allocation7 [shape = 'u8[65536]{0}', space=vmem, size = 0x10000, scoped, tag = 'input window, operand 5, single buffered']
    #allocation8 [shape = 's32[1]{0}', space=sflag, size = 0x4, scoped, tag = 'scoped memory for tpu_custom_call.1']
    %12 = vsyncpa [#allocation3], 0
    %13 = vsyncpa [#allocation5], 0
    %14 = vsyncpa [#allocation8], 0
    // Predicated region
    $region2: #{tpu_custom_call.1} parent=1 // pred_check
      _
    $region3: #{tpu_custom_call.1} parent=1 // pred_check_branch
      %16 = sbr.rel (0) target = $region5
    $region4: #{tpu_custom_call.1} parent=1 // pred_region
      %18 = vsyncadd [#allocation3], 4032
      %s19 = sshll.u32 %s0, 4
      %s20 = int_to_ptr.hbm [resolvable:$true] %s19
      %s21 = sshll.u32 [#allocation2], 4
      %s22 = int_to_ptr.vmem [resolvable:$true] %s21
      %27 = dma.hbm_to_vmem [thread:$0]  %s20, 64, %s22, [#allocation3], 64, 64, 4
    $region5: #{tpu_custom_call.1} parent=1 // pred_fallthru
      _
    // Predicated region
    $region6: #{tpu_custom_call.1} parent=1 // pred_check
      _
    $region7: #{tpu_custom_call.1} parent=1 // pred_check_branch
      %29 = sbr.rel (0) target = $region9
    $region8: #{tpu_custom_call.1} parent=1 // pred_region
      %31 = vsyncadd [#allocation5], 0
      %s32 = sshll.u32 %s1, 4
      %s33 = int_to_ptr.hbm [resolvable:$true] %s32
      %s34 = sshll.u32 [#allocation4], 4
      %s35 = int_to_ptr.vmem [resolvable:$true] %s34
      %40 = dma.hbm_to_vmem [thread:$0]  %s33, 4096, %s35, [#allocation5], 128, 128, 8
    $region9: #{tpu_custom_call.1} parent=1 // pred_fallthru
      _
    // Predicated region
    $region10: #{tpu_custom_call.1} parent=1 // pred_check
      _
    $region11: #{tpu_custom_call.1} parent=1 // pred_check_branch
      %42 = sbr.rel (0) target = $region13
    $region12: #{tpu_custom_call.1} parent=1 // pred_region
      _
    $region13: #{tpu_custom_call.1} parent=1 // pred_fallthru
      _
    // Predicated region
    $region14: #{tpu_custom_call.1} parent=1 // pred_check
      _
    $region15: #{tpu_custom_call.1} parent=1 // pred_check_branch
      %44 = sbr.rel (0) target = $region17
    $region16: #{tpu_custom_call.1} parent=1 // pred_region
      %46 = vsyncadd [#allocation5], 0
      %s47 = sshll.u32 %s3, 4
      %s48 = int_to_ptr.hbm [resolvable:$true] %s47
      %s49 = sshll.u32 [#allocation6], 4
      %s50 = int_to_ptr.vmem [resolvable:$true] %s49
      %55 = dma.hbm_to_vmem [thread:$0]  %s48, 2048, %s50, [#allocation5], 128, 128, 8
    $region17: #{tpu_custom_call.1} parent=1 // pred_fallthru
      _
    // Predicated region
    $region18: #{tpu_custom_call.1} parent=1 // pred_check
      _
    $region19: #{tpu_custom_call.1} parent=1 // pred_check_branch
      %57 = sbr.rel (0) target = $region21
    $region20: #{tpu_custom_call.1} parent=1 // pred_region
      _
    $region21: #{tpu_custom_call.1} parent=1 // pred_fallthru
      _
    // Predicated region
    $region22: #{tpu_custom_call.1} parent=1 // pred_check
      _
    $region23: #{tpu_custom_call.1} parent=1 // pred_check_branch
      %59 = sbr.rel (0) target = $region25
    $region24: #{tpu_custom_call.1} parent=1 // pred_region
      %61 = vsyncadd [#allocation8], 0
      %s62 = sshll.u32 %s5, 4
      %s63 = int_to_ptr.hbm [resolvable:$true] %s62
      %s64 = sshll.u32 [#allocation7], 4
      %s65 = int_to_ptr.vmem [resolvable:$true] %s64
      %70 = dma.hbm_to_vmem [thread:$0]  %s63, 2048, %s65, [#allocation8], 128, 128, 8
    $region25: #{tpu_custom_call.1} parent=1 // pred_fallthru
      _
    // Predicated region
    $region26: #{tpu_custom_call.1} parent=1 // pred_check
      _
    $region27: #{tpu_custom_call.1} parent=1 // pred_check_branch
      %72 = sbr.rel (0) target = $region29
    $region28: #{tpu_custom_call.1} parent=1 // pred_region
      _
    $region29: #{tpu_custom_call.1} parent=1 // pred_fallthru
      _
    // Predicated region
    $region30: #{tpu_custom_call.1} parent=1 // pred_check
      _
    $region31: #{tpu_custom_call.1} parent=1 // pred_check_branch
      %74 = sbr.rel (0) target = $region33
    $region32: #{tpu_custom_call.1} parent=1 // pred_region
      %76 = dma.done [#allocation3], 4096
    $region33: #{tpu_custom_call.1} parent=1 // pred_fallthru
      _
    // Predicated region
    $region34: #{tpu_custom_call.1} parent=1 // pred_check
      _
    $region35: #{tpu_custom_call.1} parent=1 // pred_check_branch
      %78 = sbr.rel (0) target = $region37
    $region36: #{tpu_custom_call.1} parent=1 // pred_region
      %80 = dma.done [#allocation5], 4096
    $region37: #{tpu_custom_call.1} parent=1 // pred_fallthru
      _
    // Predicated region
    $region38: #{tpu_custom_call.1} parent=1 // pred_check
      _
    $region39: #{tpu_custom_call.1} parent=1 // pred_check_branch
      %82 = sbr.rel (0) target = $region41
    $region40: #{tpu_custom_call.1} parent=1 // pred_region
      %84 = dma.done [#allocation5], 2048
    $region41: #{tpu_custom_call.1} parent=1 // pred_fallthru
      _
    // Predicated region
    $region42: #{tpu_custom_call.1} parent=1 // pred_check
      _
    $region43: #{tpu_custom_call.1} parent=1 // pred_check_branch
      %86 = sbr.rel (0) target = $region45
    $region44: #{tpu_custom_call.1} parent=1 // pred_region
      %88 = dma.done [#allocation8], 2048
    $region45: #{tpu_custom_call.1} parent=1 // pred_fallthru
      _
    %v89 = vld [vmem:[#allocation2] sm:$0xf]
    %v90 = vld [vmem:[#allocation2 + $0x4] sm:$0xf]
    %v91 = vld [vmem:[#allocation2 + $0x8] sm:$0xf]
    %v92 = vld [vmem:[#allocation2 + $0xc] sm:$0xf]
    %v93 = vld [vmem:[#allocation2 + $0x10] sm:$0xf]
    %v94 = vld [vmem:[#allocation2 + $0x14] sm:$0xf]
    %v95 = vld [vmem:[#allocation2 + $0x18] sm:$0xf]
    %v96 = vld [vmem:[#allocation2 + $0x1c] sm:$0xf]
    %v97 = vld [vmem:[#allocation2 + $0x20] sm:$0xf]
    %v98 = vld [vmem:[#allocation2 + $0x24] sm:$0xf]
    %v99 = vld [vmem:[#allocation2 + $0x28] sm:$0xf]
    %v100 = vld [vmem:[#allocation2 + $0x2c] sm:$0xf]
    %v101 = vld [vmem:[#allocation2 + $0x30] sm:$0xf]
    %v102 = vld [vmem:[#allocation2 + $0x34] sm:$0xf]
    %v103 = vld [vmem:[#allocation2 + $0x38] sm:$0xf]
    %v104 = vld [vmem:[#allocation2 + $0x3c] sm:$0xf]
    %v105 = vld [vmem:[#allocation2 + $0x40] sm:$0xf]
    %v106 = vld [vmem:[#allocation2 + $0x44] sm:$0xf]
    %v107 = vld [vmem:[#allocation2 + $0x48] sm:$0xf]
    %v108 = vld [vmem:[#allocation2 + $0x4c] sm:$0xf]
    %v109 = vld [vmem:[#allocation2 + $0x50] sm:$0xf]
    %v110 = vld [vmem:[#allocation2 + $0x54] sm:$0xf]
    %v111 = vld [vmem:[#allocation2 + $0x58] sm:$0xf]
    %v112 = vld [vmem:[#allocation2 + $0x5c] sm:$0xf]
    %v113 = vld [vmem:[#allocation2 + $0x60] sm:$0xf]
    %v114 = vld [vmem:[#allocation2 + $0x64] sm:$0xf]
    %v115 = vld [vmem:[#allocation2 + $0x68] sm:$0xf]
    %v116 = vld [vmem:[#allocation2 + $0x6c] sm:$0xf]
    %v117 = vld [vmem:[#allocation2 + $0x70] sm:$0xf]
    %v118 = vld [vmem:[#allocation2 + $0x74] sm:$0xf]
    %v119 = vld [vmem:[#allocation2 + $0x78] sm:$0xf]
    %v120 = vld [vmem:[#allocation2 + $0x7c] sm:$0xf]
    %v121 = vld [vmem:[#allocation2 + $0x80] sm:$0xf]
    %v122 = vld [vmem:[#allocation2 + $0x84] sm:$0xf]
    %v123 = vld [vmem:[#allocation2 + $0x88] sm:$0xf]
    %v124 = vld [vmem:[#allocation2 + $0x8c] sm:$0xf]
    %v125 = vld [vmem:[#allocation2 + $0x90] sm:$0xf]
    %v126 = vld [vmem:[#allocation2 + $0x94] sm:$0xf]
    %v127 = vld [vmem:[#allocation2 + $0x98] sm:$0xf]
    %v128 = vld [vmem:[#allocation2 + $0x9c] sm:$0xf]
    %v129 = vld [vmem:[#allocation2 + $0xa0] sm:$0xf]
    %v130 = vld [vmem:[#allocation2 + $0xa4] sm:$0xf]
    %v131 = vld [vmem:[#allocation2 + $0xa8] sm:$0xf]
    %v132 = vld [vmem:[#allocation2 + $0xac] sm:$0xf]
    %v133 = vld [vmem:[#allocation2 + $0xb0] sm:$0xf]
    %v134 = vld [vmem:[#allocation2 + $0xb4] sm:$0xf]
    %v135 = vld [vmem:[#allocation2 + $0xb8] sm:$0xf]
    %v136 = vld [vmem:[#allocation2 + $0xbc] sm:$0xf]
    %v137 = vld [vmem:[#allocation2 + $0xc0] sm:$0xf]
    %v138 = vld [vmem:[#allocation2 + $0xc4] sm:$0xf]
    %v139 = vld [vmem:[#allocation2 + $0xc8] sm:$0xf]
    %v140 = vld [vmem:[#allocation2 + $0xcc] sm:$0xf]
    %v141 = vld [vmem:[#allocation2 + $0xd0] sm:$0xf]
    %v142 = vld [vmem:[#allocation2 + $0xd4] sm:$0xf]
    %v143 = vld [vmem:[#allocation2 + $0xd8] sm:$0xf]
    %v144 = vld [vmem:[#allocation2 + $0xdc] sm:$0xf]
    %v145 = vld [vmem:[#allocation2 + $0xe0] sm:$0xf]
    %v146 = vld [vmem:[#allocation2 + $0xe4] sm:$0xf]
    %v147 = vld [vmem:[#allocation2 + $0xe8] sm:$0xf]
    %v148 = vld [vmem:[#allocation2 + $0xec] sm:$0xf]
    %v149 = vld [vmem:[#allocation2 + $0xf0] sm:$0xf]
    %v150 = vld [vmem:[#allocation2 + $0xf4] sm:$0xf]
    %v151 = vld [vmem:[#allocation2 + $0xf8] sm:$0xf]
    %v152 = vld [vmem:[#allocation2 + $0xfc] sm:$0xf]
    %v153 = vld [vmem:[#allocation4] sm:$0xff]
    %v154 = vld [vmem:[#allocation4 + $0x8] sm:$0xff]
    %v155 = vld [vmem:[#allocation4 + $0x10] sm:$0xff]
    %v156 = vld [vmem:[#allocation4 + $0x18] sm:$0xff]
    %v157 = vld [vmem:[#allocation4 + $0x20] sm:$0xff]
    %v158 = vld [vmem:[#allocation4 + $0x28] sm:$0xff]
    %v159 = vld [vmem:[#allocation4 + $0x30] sm:$0xff]
    %v160 = vld [vmem:[#allocation4 + $0x38] sm:$0xff]
    %v161 = vld [vmem:[#allocation4 + $0x40] sm:$0xff]
    %v162 = vld [vmem:[#allocation4 + $0x48] sm:$0xff]
    %v163 = vld [vmem:[#allocation4 + $0x50] sm:$0xff]
    %v164 = vld [vmem:[#allocation4 + $0x58] sm:$0xff]
    %v165 = vld [vmem:[#allocation4 + $0x60] sm:$0xff]
    %v166 = vld [vmem:[#allocation4 + $0x68] sm:$0xff]
    %v167 = vld [vmem:[#allocation4 + $0x70] sm:$0xff]
    %v168 = vld [vmem:[#allocation4 + $0x78] sm:$0xff]
    %v169 = vld [vmem:[#allocation4 + $0x80] sm:$0xff]
    %v170 = vld [vmem:[#allocation4 + $0x88] sm:$0xff]
    %v171 = vld [vmem:[#allocation4 + $0x90] sm:$0xff]
    %v172 = vld [vmem:[#allocation4 + $0x98] sm:$0xff]
    %v173 = vld [vmem:[#allocation4 + $0xa0] sm:$0xff]
    %v174 = vld [vmem:[#allocation4 + $0xa8] sm:$0xff]
    %v175 = vld [vmem:[#allocation4 + $0xb0] sm:$0xff]
    %v176 = vld [vmem:[#allocation4 + $0xb8] sm:$0xff]
    %v177 = vld [vmem:[#allocation4 + $0xc0] sm:$0xff]
    %v178 = vld [vmem:[#allocation4 + $0xc8] sm:$0xff]
    %v179 = vld [vmem:[#allocation4 + $0xd0] sm:$0xff]
    %v180 = vld [vmem:[#allocation4 + $0xd8] sm:$0xff]
    %v181 = vld [vmem:[#allocation4 + $0xe0] sm:$0xff]
    %v182 = vld [vmem:[#allocation4 + $0xe8] sm:$0xff]
    %v183 = vld [vmem:[#allocation4 + $0xf0] sm:$0xff]
    %v184 = vld [vmem:[#allocation4 + $0xf8] sm:$0xff]
    %v185 = vld [vmem:[%s2] sm:$0x1]
    %v187 = vperm.slane %v185, 0
    %253 = vst [vmem:[#allocation1] ss:$4 sm:$0xff] %v89
    %s254 = scalar_lea.vmem [#allocation1], 1
    %255 = vst [vmem:[%s254] ss:$4 sm:$0xff] %v90
    %s256 = scalar_lea.vmem [#allocation1], 2
    %257 = vst [vmem:[%s256] ss:$4 sm:$0xff] %v91
    %s258 = scalar_lea.vmem [#allocation1], 3
    %259 = vst [vmem:[%s258] ss:$4 sm:$0xff] %v92
    %s260 = scalar_lea.vmem [#allocation1], 32
    %261 = vst [vmem:[%s260] ss:$4 sm:$0xff] %v93
    %s262 = scalar_lea.vmem [#allocation1], 33
    %263 = vst [vmem:[%s262] ss:$4 sm:$0xff] %v94
    %s264 = scalar_lea.vmem [#allocation1], 34
    %265 = vst [vmem:[%s264] ss:$4 sm:$0xff] %v95
    %s266 = scalar_lea.vmem [#allocation1], 35
    %267 = vst [vmem:[%s266] ss:$4 sm:$0xff] %v96
    %v268 = vld.sshfl [vmem:[#allocation1] sm:$0xff pattern:$0x73625140]
    %v269 = vld.sshfl [vmem:[#allocation1 + $0x8] sm:$0xff pattern:$0x73625140]
    %v270 = vld.sshfl [vmem:[#allocation1 + $0x20] sm:$0xff pattern:$0x73625140]
    %v271 = vld.sshfl [vmem:[#allocation1 + $0x28] sm:$0xff pattern:$0x73625140]
    %272 = vst [vmem:[#allocation1] ss:$4 sm:$0xff] %v97
    %273 = vst [vmem:[%s254] ss:$4 sm:$0xff] %v98
    %274 = vst [vmem:[%s256] ss:$4 sm:$0xff] %v99
    %275 = vst [vmem:[%s258] ss:$4 sm:$0xff] %v100
    %276 = vst [vmem:[%s260] ss:$4 sm:$0xff] %v101
    %277 = vst [vmem:[%s262] ss:$4 sm:$0xff] %v102
    %278 = vst [vmem:[%s264] ss:$4 sm:$0xff] %v103
    %279 = vst [vmem:[%s266] ss:$4 sm:$0xff] %v104
    %v280 = vld.sshfl [vmem:[#allocation1] sm:$0xff pattern:$0x73625140]
    %v281 = vld.sshfl [vmem:[#allocation1 + $0x8] sm:$0xff pattern:$0x73625140]
    %v282 = vld.sshfl [vmem:[#allocation1 + $0x20] sm:$0xff pattern:$0x73625140]
    %v283 = vld.sshfl [vmem:[#allocation1 + $0x28] sm:$0xff pattern:$0x73625140]
    %284 = vst [vmem:[#allocation1] ss:$4 sm:$0xff] %v105
    %285 = vst [vmem:[%s254] ss:$4 sm:$0xff] %v106
    %286 = vst [vmem:[%s256] ss:$4 sm:$0xff] %v107
    %287 = vst [vmem:[%s258] ss:$4 sm:$0xff] %v108
    %288 = vst [vmem:[%s260] ss:$4 sm:$0xff] %v109
    %289 = vst [vmem:[%s262] ss:$4 sm:$0xff] %v110
    %290 = vst [vmem:[%s264] ss:$4 sm:$0xff] %v111
    %291 = vst [vmem:[%s266] ss:$4 sm:$0xff] %v112
    %v292 = vld.sshfl [vmem:[#allocation1] sm:$0xff pattern:$0x73625140]
    %v293 = vld.sshfl [vmem:[#allocation1 + $0x8] sm:$0xff pattern:$0x73625140]
    %v294 = vld.sshfl [vmem:[#allocation1 + $0x20] sm:$0xff pattern:$0x73625140]
    %v295 = vld.sshfl [vmem:[#allocation1 + $0x28] sm:$0xff pattern:$0x73625140]
    %296 = vst [vmem:[#allocation1] ss:$4 sm:$0xff] %v113
    %297 = vst [vmem:[%s254] ss:$4 sm:$0xff] %v114
    %298 = vst [vmem:[%s256] ss:$4 sm:$0xff] %v115
    %299 = vst [vmem:[%s258] ss:$4 sm:$0xff] %v116
    %300 = vst [vmem:[%s260] ss:$4 sm:$0xff] %v117
    %301 = vst [vmem:[%s262] ss:$4 sm:$0xff] %v118
    %302 = vst [vmem:[%s264] ss:$4 sm:$0xff] %v119
    %303 = vst [vmem:[%s266] ss:$4 sm:$0xff] %v120
    %v304 = vld.sshfl [vmem:[#allocation1] sm:$0xff pattern:$0x73625140]
    %v305 = vld.sshfl [vmem:[#allocation1 + $0x8] sm:$0xff pattern:$0x73625140]
    %v306 = vld.sshfl [vmem:[#allocation1 + $0x20] sm:$0xff pattern:$0x73625140]
    %v307 = vld.sshfl [vmem:[#allocation1 + $0x28] sm:$0xff pattern:$0x73625140]
    %308 = vst [vmem:[#allocation1] ss:$4 sm:$0xff] %v121
    %309 = vst [vmem:[%s254] ss:$4 sm:$0xff] %v122
    %310 = vst [vmem:[%s256] ss:$4 sm:$0xff] %v123
    %311 = vst [vmem:[%s258] ss:$4 sm:$0xff] %v124
    %312 = vst [vmem:[%s260] ss:$4 sm:$0xff] %v125
    %313 = vst [vmem:[%s262] ss:$4 sm:$0xff] %v126
    %314 = vst [vmem:[%s264] ss:$4 sm:$0xff] %v127
    %315 = vst [vmem:[%s266] ss:$4 sm:$0xff] %v128
    %v316 = vld.sshfl [vmem:[#allocation1] sm:$0xff pattern:$0x73625140]
    %v317 = vld.sshfl [vmem:[#allocation1 + $0x8] sm:$0xff pattern:$0x73625140]
    %v318 = vld.sshfl [vmem:[#allocation1 + $0x20] sm:$0xff pattern:$0x73625140]
    %v319 = vld.sshfl [vmem:[#allocation1 + $0x28] sm:$0xff pattern:$0x73625140]
    %320 = vst [vmem:[#allocation1] ss:$4 sm:$0xff] %v129
    %321 = vst [vmem:[%s254] ss:$4 sm:$0xff] %v130
    %322 = vst [vmem:[%s256] ss:$4 sm:$0xff] %v131
    %323 = vst [vmem:[%s258] ss:$4 sm:$0xff] %v132
    %324 = vst [vmem:[%s260] ss:$4 sm:$0xff] %v133
    %325 = vst [vmem:[%s262] ss:$4 sm:$0xff] %v134
    %326 = vst [vmem:[%s264] ss:$4 sm:$0xff] %v135
    %327 = vst [vmem:[%s266] ss:$4 sm:$0xff] %v136
    %v328 = vld.sshfl [vmem:[#allocation1] sm:$0xff pattern:$0x73625140]
    %v329 = vld.sshfl [vmem:[#allocation1 + $0x8] sm:$0xff pattern:$0x73625140]
    %v330 = vld.sshfl [vmem:[#allocation1 + $0x20] sm:$0xff pattern:$0x73625140]
    %v331 = vld.sshfl [vmem:[#allocation1 + $0x28] sm:$0xff pattern:$0x73625140]
    %332 = vst [vmem:[#allocation1] ss:$4 sm:$0xff] %v137
    %333 = vst [vmem:[%s254] ss:$4 sm:$0xff] %v138
    %334 = vst [vmem:[%s256] ss:$4 sm:$0xff] %v139
    %335 = vst [vmem:[%s258] ss:$4 sm:$0xff] %v140
    %336 = vst [vmem:[%s260] ss:$4 sm:$0xff] %v141
    %337 = vst [vmem:[%s262] ss:$4 sm:$0xff] %v142
    %338 = vst [vmem:[%s264] ss:$4 sm:$0xff] %v143
    %339 = vst [vmem:[%s266] ss:$4 sm:$0xff] %v144
    %v340 = vld.sshfl [vmem:[#allocation1] sm:$0xff pattern:$0x73625140]
    %v341 = vld.sshfl [vmem:[#allocation1 + $0x8] sm:$0xff pattern:$0x73625140]
    %v342 = vld.sshfl [vmem:[#allocation1 + $0x20] sm:$0xff pattern:$0x73625140]
    %v343 = vld.sshfl [vmem:[#allocation1 + $0x28] sm:$0xff pattern:$0x73625140]
    %344 = vst [vmem:[#allocation1] ss:$4 sm:$0xff] %v145
    %345 = vst [vmem:[%s254] ss:$4 sm:$0xff] %v146
    %346 = vst [vmem:[%s256] ss:$4 sm:$0xff] %v147
    %347 = vst [vmem:[%s258] ss:$4 sm:$0xff] %v148
    %348 = vst [vmem:[%s260] ss:$4 sm:$0xff] %v149
    %349 = vst [vmem:[%s262] ss:$4 sm:$0xff] %v150
    %350 = vst [vmem:[%s264] ss:$4 sm:$0xff] %v151
    %351 = vst [vmem:[%s266] ss:$4 sm:$0xff] %v152
    %v352 = vld.sshfl [vmem:[#allocation1] sm:$0xff pattern:$0x73625140]
    %v353 = vld.sshfl [vmem:[#allocation1 + $0x8] sm:$0xff pattern:$0x73625140]
    %v354 = vld.sshfl [vmem:[#allocation1 + $0x20] sm:$0xff pattern:$0x73625140]
    %v355 = vld.sshfl [vmem:[#allocation1 + $0x28] sm:$0xff pattern:$0x73625140]
    %388 = vmatpush.msra.mxu0 %v168
    %389 = vmatpush.msra.mxu0 %v167
    %390 = vmatpush.msra.mxu0 %v166
    %391 = vmatpush.msra.mxu0 %v165
    %392 = vmatpush.msra.mxu0 %v164
    %393 = vmatpush.msra.mxu0 %v163
    %394 = vmatpush.msra.mxu0 %v162
    %395 = vmatpush.msra.mxu0 %v161
    %396 = vmatpush.msra.mxu0 %v160
    %397 = vmatpush.msra.mxu0 %v159
    %398 = vmatpush.msra.mxu0 %v158
    %399 = vmatpush.msra.mxu0 %v157
    %400 = vmatpush.msra.mxu0 %v156
    %401 = vmatpush.msra.mxu0 %v155
    %402 = vmatpush.msra.mxu0 %v154
    %403 = vmatpush.msra.mxu0 %v153
    %404 = vmatmul.f32.gmra.mxu0 %v268
    %v405 = vpop.f32.mrf.mxu0
    %v406 = vadd.f32 %v187, %v405
    %407 = vmatmul.f32.gmra.mxu0 %v270
    %v408 = vpop.f32.mrf.mxu0
    %v409 = vadd.f32 %v187, %v408
    %410 = vmatmul.f32.gmra.mxu0 %v280
    %v411 = vpop.f32.mrf.mxu0
    %v412 = vadd.f32 %v187, %v411
    %413 = vmatmul.f32.gmra.mxu0 %v282
    %v414 = vpop.f32.mrf.mxu0
    %v415 = vadd.f32 %v187, %v414
    %416 = vmatmul.f32.gmra.mxu0 %v292
    %v417 = vpop.f32.mrf.mxu0
    %v418 = vadd.f32 %v187, %v417
    %419 = vmatmul.f32.gmra.mxu0 %v294
    %v420 = vpop.f32.mrf.mxu0
    %v421 = vadd.f32 %v187, %v420
    %422 = vmatmul.f32.gmra.mxu0 %v304
    %v423 = vpop.f32.mrf.mxu0
    %v424 = vadd.f32 %v187, %v423
    %425 = vmatmul.f32.gmra.mxu0 %v306
    %v426 = vpop.f32.mrf.mxu0
    %v427 = vadd.f32 %v187, %v426
    %428 = vmatmul.f32.gmra.mxu0 %v316
    %v429 = vpop.f32.mrf.mxu0
    %v430 = vadd.f32 %v187, %v429
    %431 = vmatmul.f32.gmra.mxu0 %v318
    %v432 = vpop.f32.mrf.mxu0
    %v433 = vadd.f32 %v187, %v432
    %434 = vmatmul.f32.gmra.mxu0 %v328
    %v435 = vpop.f32.mrf.mxu0
    %v436 = vadd.f32 %v187, %v435
    %437 = vmatmul.f32.gmra.mxu0 %v330
    %v438 = vpop.f32.mrf.mxu0
    %v439 = vadd.f32 %v187, %v438
    %440 = vmatmul.f32.gmra.mxu0 %v340
    %v441 = vpop.f32.mrf.mxu0
    %v442 = vadd.f32 %v187, %v441
    %443 = vmatmul.f32.gmra.mxu0 %v342
    %v444 = vpop.f32.mrf.mxu0
    %v445 = vadd.f32 %v187, %v444
    %446 = vmatmul.f32.gmra.mxu0 %v352
    %v447 = vpop.f32.mrf.mxu0
    %v448 = vadd.f32 %v187, %v447
    %449 = vmatmul.f32.gmra.mxu0 %v354
    %v450 = vpop.f32.mrf.mxu0
    %v451 = vadd.f32 %v187, %v450
    %452 = vdwg.mxu0
    %453 = vmatpush.msra.mxu0 %v184
    %454 = vmatpush.msra.mxu0 %v183
    %455 = vmatpush.msra.mxu0 %v182
    %456 = vmatpush.msra.mxu0 %v181
    %457 = vmatpush.msra.mxu0 %v180
    %458 = vmatpush.msra.mxu0 %v179
    %459 = vmatpush.msra.mxu0 %v178
    %460 = vmatpush.msra.mxu0 %v177
    %461 = vmatpush.msra.mxu0 %v176
    %462 = vmatpush.msra.mxu0 %v175
    %463 = vmatpush.msra.mxu0 %v174
    %464 = vmatpush.msra.mxu0 %v173
    %465 = vmatpush.msra.mxu0 %v172
    %466 = vmatpush.msra.mxu0 %v171
    %467 = vmatpush.msra.mxu0 %v170
    %468 = vmatpush.msra.mxu0 %v169
    %469 = vmatmul.f32.gmra.mxu0 %v269
    %v470 = vpop.f32.mrf.mxu0
    %v471 = vadd.f32 %v406, %v470
    %472 = vmatmul.f32.gmra.mxu0 %v271
    %v473 = vpop.f32.mrf.mxu0
    %v474 = vadd.f32 %v409, %v473
    %475 = vmatmul.f32.gmra.mxu0 %v281
    %v476 = vpop.f32.mrf.mxu0
    %v477 = vadd.f32 %v412, %v476
    %478 = vmatmul.f32.gmra.mxu0 %v283
    %v479 = vpop.f32.mrf.mxu0
    %v480 = vadd.f32 %v415, %v479
    %481 = vmatmul.f32.gmra.mxu0 %v293
    %v482 = vpop.f32.mrf.mxu0
    %v483 = vadd.f32 %v418, %v482
    %484 = vmatmul.f32.gmra.mxu0 %v295
    %v485 = vpop.f32.mrf.mxu0
    %v486 = vadd.f32 %v421, %v485
    %487 = vmatmul.f32.gmra.mxu0 %v305
    %v488 = vpop.f32.mrf.mxu0
    %v489 = vadd.f32 %v424, %v488
    %490 = vmatmul.f32.gmra.mxu0 %v307
    %v491 = vpop.f32.mrf.mxu0
    %v492 = vadd.f32 %v427, %v491
    %493 = vmatmul.f32.gmra.mxu0 %v317
    %v494 = vpop.f32.mrf.mxu0
    %v495 = vadd.f32 %v430, %v494
    %496 = vmatmul.f32.gmra.mxu0 %v319
    %v497 = vpop.f32.mrf.mxu0
    %v498 = vadd.f32 %v433, %v497
    %499 = vmatmul.f32.gmra.mxu0 %v329
    %v500 = vpop.f32.mrf.mxu0
    %v501 = vadd.f32 %v436, %v500
    %502 = vmatmul.f32.gmra.mxu0 %v331
    %v503 = vpop.f32.mrf.mxu0
    %v504 = vadd.f32 %v439, %v503
    %505 = vmatmul.f32.gmra.mxu0 %v341
    %v506 = vpop.f32.mrf.mxu0
    %v507 = vadd.f32 %v442, %v506
    %508 = vmatmul.f32.gmra.mxu0 %v343
    %v509 = vpop.f32.mrf.mxu0
    %v510 = vadd.f32 %v445, %v509
    %511 = vmatmul.f32.gmra.mxu0 %v353
    %v512 = vpop.f32.mrf.mxu0
    %v513 = vadd.f32 %v448, %v512
    %514 = vmatmul.f32.gmra.mxu0 %v355
    %v515 = vpop.f32.mrf.mxu0
    %v516 = vadd.f32 %v451, %v515
    %517 = vdwg.mxu0
    %v518 = vmax.f32 %v471, 0.0
    %v519 = vmax.f32 %v474, 0.0
    %v520 = vmax.f32 %v477, 0.0
    %v521 = vmax.f32 %v480, 0.0
    %v522 = vmax.f32 %v483, 0.0
    %v523 = vmax.f32 %v486, 0.0
    %v524 = vmax.f32 %v489, 0.0
    %v525 = vmax.f32 %v492, 0.0
    %v526 = vmax.f32 %v495, 0.0
    %v527 = vmax.f32 %v498, 0.0
    %v528 = vmax.f32 %v501, 0.0
    %v529 = vmax.f32 %v504, 0.0
    %v530 = vmax.f32 %v507, 0.0
    %v531 = vmax.f32 %v510, 0.0
    %v532 = vmax.f32 %v513, 0.0
    %v533 = vmax.f32 %v516, 0.0
    %v534 = vld [vmem:[#allocation6] sm:$0xff]
    %v535 = vld [vmem:[#allocation6 + $0x8] sm:$0xff]
    %v536 = vld [vmem:[#allocation6 + $0x10] sm:$0xff]
    %v537 = vld [vmem:[#allocation6 + $0x18] sm:$0xff]
    %v538 = vld [vmem:[#allocation6 + $0x20] sm:$0xff]
    %v539 = vld [vmem:[#allocation6 + $0x28] sm:$0xff]
    %v540 = vld [vmem:[#allocation6 + $0x30] sm:$0xff]
    %v541 = vld [vmem:[#allocation6 + $0x38] sm:$0xff]
    %v542 = vld [vmem:[#allocation6 + $0x40] sm:$0xff]
    %v543 = vld [vmem:[#allocation6 + $0x48] sm:$0xff]
    %v544 = vld [vmem:[#allocation6 + $0x50] sm:$0xff]
    %v545 = vld [vmem:[#allocation6 + $0x58] sm:$0xff]
    %v546 = vld [vmem:[#allocation6 + $0x60] sm:$0xff]
    %v547 = vld [vmem:[#allocation6 + $0x68] sm:$0xff]
    %v548 = vld [vmem:[#allocation6 + $0x70] sm:$0xff]
    %v549 = vld [vmem:[#allocation6 + $0x78] sm:$0xff]
    %v550 = vld [vmem:[%s4] sm:$0x1]
    %v552 = vperm.slane %v550, 0
    %554 = vmatpush.msra.mxu0 %v549
    %555 = vmatpush.msra.mxu0 %v548
    %556 = vmatpush.msra.mxu0 %v547
    %557 = vmatpush.msra.mxu0 %v546
    %558 = vmatpush.msra.mxu0 %v545
    %559 = vmatpush.msra.mxu0 %v544
    %560 = vmatpush.msra.mxu0 %v543
    %561 = vmatpush.msra.mxu0 %v542
    %562 = vmatpush.msra.mxu0 %v541
    %563 = vmatpush.msra.mxu0 %v540
    %564 = vmatpush.msra.mxu0 %v539
    %565 = vmatpush.msra.mxu0 %v538
    %566 = vmatpush.msra.mxu0 %v537
    %567 = vmatpush.msra.mxu0 %v536
    %568 = vmatpush.msra.mxu0 %v535
    %569 = vmatpush.msra.mxu0 %v534
    %570 = vmatmul.f32.gmra.mxu0 %v518
    %v571 = vpop.f32.mrf.mxu0
    %v572 = vadd.f32 %v552, %v571
    %573 = vmatmul.f32.gmra.mxu0 %v519
    %v574 = vpop.f32.mrf.mxu0
    %v575 = vadd.f32 %v552, %v574
    %576 = vmatmul.f32.gmra.mxu0 %v520
    %v577 = vpop.f32.mrf.mxu0
    %v578 = vadd.f32 %v552, %v577
    %579 = vmatmul.f32.gmra.mxu0 %v521
    %v580 = vpop.f32.mrf.mxu0
    %v581 = vadd.f32 %v552, %v580
    %582 = vmatmul.f32.gmra.mxu0 %v522
    %v583 = vpop.f32.mrf.mxu0
    %v584 = vadd.f32 %v552, %v583
    %585 = vmatmul.f32.gmra.mxu0 %v523
    %v586 = vpop.f32.mrf.mxu0
    %v587 = vadd.f32 %v552, %v586
    %588 = vmatmul.f32.gmra.mxu0 %v524
    %v589 = vpop.f32.mrf.mxu0
    %v590 = vadd.f32 %v552, %v589
    %591 = vmatmul.f32.gmra.mxu0 %v525
    %v592 = vpop.f32.mrf.mxu0
    %v593 = vadd.f32 %v552, %v592
    %594 = vmatmul.f32.gmra.mxu0 %v526
    %v595 = vpop.f32.mrf.mxu0
    %v596 = vadd.f32 %v552, %v595
    %597 = vmatmul.f32.gmra.mxu0 %v527
    %v598 = vpop.f32.mrf.mxu0
    %v599 = vadd.f32 %v552, %v598
    %600 = vmatmul.f32.gmra.mxu0 %v528
    %v601 = vpop.f32.mrf.mxu0
    %v602 = vadd.f32 %v552, %v601
    %603 = vmatmul.f32.gmra.mxu0 %v529
    %v604 = vpop.f32.mrf.mxu0
    %v605 = vadd.f32 %v552, %v604
    %606 = vmatmul.f32.gmra.mxu0 %v530
    %v607 = vpop.f32.mrf.mxu0
    %v608 = vadd.f32 %v552, %v607
    %609 = vmatmul.f32.gmra.mxu0 %v531
    %v610 = vpop.f32.mrf.mxu0
    %v611 = vadd.f32 %v552, %v610
    %612 = vmatmul.f32.gmra.mxu0 %v532
    %v613 = vpop.f32.mrf.mxu0
    %v614 = vadd.f32 %v552, %v613
    %615 = vmatmul.f32.gmra.mxu0 %v533
    %v616 = vpop.f32.mrf.mxu0
    %v617 = vadd.f32 %v552, %v616
    %618 = vdwg.mxu0
    %v619 = vmax.f32 %v572, 0.0
    %v620 = vmax.f32 %v575, 0.0
    %v621 = vmax.f32 %v578, 0.0
    %v622 = vmax.f32 %v581, 0.0
    %v623 = vmax.f32 %v584, 0.0
    %v624 = vmax.f32 %v587, 0.0
    %v625 = vmax.f32 %v590, 0.0
    %v626 = vmax.f32 %v593, 0.0
    %v627 = vmax.f32 %v596, 0.0
    %v628 = vmax.f32 %v599, 0.0
    %v629 = vmax.f32 %v602, 0.0
    %v630 = vmax.f32 %v605, 0.0
    %v631 = vmax.f32 %v608, 0.0
    %v632 = vmax.f32 %v611, 0.0
    %v633 = vmax.f32 %v614, 0.0
    %v634 = vmax.f32 %v617, 0.0
    %v635 = vld [vmem:[#allocation7] sm:$0xff]
    %v636 = vld [vmem:[#allocation7 + $0x8] sm:$0xff]
    %v637 = vld [vmem:[#allocation7 + $0x10] sm:$0xff]
    %v638 = vld [vmem:[#allocation7 + $0x18] sm:$0xff]
    %v639 = vld [vmem:[#allocation7 + $0x20] sm:$0xff]
    %v640 = vld [vmem:[#allocation7 + $0x28] sm:$0xff]
    %v641 = vld [vmem:[#allocation7 + $0x30] sm:$0xff]
    %v642 = vld [vmem:[#allocation7 + $0x38] sm:$0xff]
    %v643 = vld [vmem:[#allocation7 + $0x40] sm:$0xff]
    %v644 = vld [vmem:[#allocation7 + $0x48] sm:$0xff]
    %v645 = vld [vmem:[#allocation7 + $0x50] sm:$0xff]
    %v646 = vld [vmem:[#allocation7 + $0x58] sm:$0xff]
    %v647 = vld [vmem:[#allocation7 + $0x60] sm:$0xff]
    %v648 = vld [vmem:[#allocation7 + $0x68] sm:$0xff]
    %v649 = vld [vmem:[#allocation7 + $0x70] sm:$0xff]
    %v650 = vld [vmem:[#allocation7 + $0x78] sm:$0xff]
    %v651 = vld [vmem:[%s6] sm:$0x1]
    %v653 = vperm.slane %v651, 0
    %655 = vmatpush.msra.mxu0 %v650
    %656 = vmatpush.msra.mxu0 %v649
    %657 = vmatpush.msra.mxu0 %v648
    %658 = vmatpush.msra.mxu0 %v647
    %659 = vmatpush.msra.mxu0 %v646
    %660 = vmatpush.msra.mxu0 %v645
    %661 = vmatpush.msra.mxu0 %v644
    %662 = vmatpush.msra.mxu0 %v643
    %663 = vmatpush.msra.mxu0 %v642
    %664 = vmatpush.msra.mxu0 %v641
    %665 = vmatpush.msra.mxu0 %v640
    %666 = vmatpush.msra.mxu0 %v639
    %667 = vmatpush.msra.mxu0 %v638
    %668 = vmatpush.msra.mxu0 %v637
    %669 = vmatpush.msra.mxu0 %v636
    %670 = vmatpush.msra.mxu0 %v635
    %671 = vmatmul.f32.gmra.mxu0 %v619
    %v672 = vpop.f32.mrf.mxu0
    %v673 = vadd.f32 %v653, %v672
    %674 = vmatmul.f32.gmra.mxu0 %v620
    %v675 = vpop.f32.mrf.mxu0
    %v676 = vadd.f32 %v653, %v675
    %677 = vmatmul.f32.gmra.mxu0 %v621
    %v678 = vpop.f32.mrf.mxu0
    %v679 = vadd.f32 %v653, %v678
    %680 = vmatmul.f32.gmra.mxu0 %v622
    %v681 = vpop.f32.mrf.mxu0
    %v682 = vadd.f32 %v653, %v681
    %683 = vmatmul.f32.gmra.mxu0 %v623
    %v684 = vpop.f32.mrf.mxu0
    %v685 = vadd.f32 %v653, %v684
    %686 = vmatmul.f32.gmra.mxu0 %v624
    %v687 = vpop.f32.mrf.mxu0
    %v688 = vadd.f32 %v653, %v687
    %689 = vmatmul.f32.gmra.mxu0 %v625
    %v690 = vpop.f32.mrf.mxu0
    %v691 = vadd.f32 %v653, %v690
    %692 = vmatmul.f32.gmra.mxu0 %v626
    %v693 = vpop.f32.mrf.mxu0
    %v694 = vadd.f32 %v653, %v693
    %695 = vmatmul.f32.gmra.mxu0 %v627
    %v696 = vpop.f32.mrf.mxu0
    %v697 = vadd.f32 %v653, %v696
    %698 = vmatmul.f32.gmra.mxu0 %v628
    %v699 = vpop.f32.mrf.mxu0
    %v700 = vadd.f32 %v653, %v699
    %701 = vmatmul.f32.gmra.mxu0 %v629
    %v702 = vpop.f32.mrf.mxu0
    %v703 = vadd.f32 %v653, %v702
    %704 = vmatmul.f32.gmra.mxu0 %v630
    %v705 = vpop.f32.mrf.mxu0
    %v706 = vadd.f32 %v653, %v705
    %707 = vmatmul.f32.gmra.mxu0 %v631
    %v708 = vpop.f32.mrf.mxu0
    %v709 = vadd.f32 %v653, %v708
    %710 = vmatmul.f32.gmra.mxu0 %v632
    %v711 = vpop.f32.mrf.mxu0
    %v712 = vadd.f32 %v653, %v711
    %713 = vmatmul.f32.gmra.mxu0 %v633
    %v714 = vpop.f32.mrf.mxu0
    %v715 = vadd.f32 %v653, %v714
    %716 = vmatmul.f32.gmra.mxu0 %v634
    %v717 = vpop.f32.mrf.mxu0
    %v718 = vadd.f32 %v653, %v717
    %719 = vdwg.mxu0
    %720 = vxpose.xlu0.b32.start [1/16] %v673, 128
    %721 = vxpose.xlu0.b32.cont [2/16] %v676, 128
    %722 = vxpose.xlu0.b32.cont [3/16] %v679, 128
    %723 = vxpose.xlu0.b32.cont [4/16] %v682, 128
    %724 = vxpose.xlu0.b32.cont [5/16] %v685, 128
    %725 = vxpose.xlu0.b32.cont [6/16] %v688, 128
    %726 = vxpose.xlu0.b32.cont [7/16] %v691, 128
    %727 = vxpose.xlu0.b32.cont [8/16] %v694, 128
    %728 = vxpose.xlu0.b32.cont [9/16] %v697, 128
    %729 = vxpose.xlu0.b32.cont [10/16] %v700, 128
    %730 = vxpose.xlu0.b32.cont [11/16] %v703, 128
    %731 = vxpose.xlu0.b32.cont [12/16] %v706, 128
    %732 = vxpose.xlu0.b32.cont [13/16] %v709, 128
    %733 = vxpose.xlu0.b32.cont [14/16] %v712, 128
    %734 = vxpose.xlu0.b32.cont [15/16] %v715, 128
    %735 = vxpose.xlu0.b32.end [16/16] %v718, 128
    %v736 = vpop.trf.xlu0
    %v737 = vpop.trf.xlu0
    %v738 = vpop.trf.xlu0
    %v739 = vpop.trf.xlu0
    %v740 = vpop.trf.xlu0
    %v741 = vpop.trf.xlu0
    %v742 = vpop.trf.xlu0
    %v743 = vpop.trf.xlu0
    %v744 = vpop.trf.xlu0
    %v745 = vpop.trf.xlu0
    %v746 = vpop.trf.xlu0
    %v747 = vpop.trf.xlu0
    %v748 = vpop.trf.xlu0
    %v749 = vpop.trf.xlu0
    %v750 = vpop.trf.xlu0
    %v751 = vpop.trf.xlu0
    %752 = vst [vmem:[%s7] sm:$0xff] %v736
    %753 = vst [vmem:[%s7 + $0x8] sm:$0x3] %v737
    // Predicated region
    $region46: #{tpu_custom_call.1} parent=1 // pred_check
      _
    $region47: #{tpu_custom_call.1} parent=1 // pred_check_branch
      %755 = sbr.rel (0) target = $region49
    $region48: #{tpu_custom_call.1} parent=1 // pred_region
      _
    $region49: #{tpu_custom_call.1} parent=1 // pred_fallthru
      _
    // Predicated region
    $region50: #{tpu_custom_call.1} parent=1 // pred_check
      _
    $region51: #{tpu_custom_call.1} parent=1 // pred_check_branch
      %757 = sbr.rel (0) target = $region53
    $region52: #{tpu_custom_call.1} parent=1 // pred_region
      _
    $region53: #{tpu_custom_call.1} parent=1 // pred_fallthru
      _
    %758 = vsyncpa [#allocation3], 1
    %759 = vsyncpa [#allocation5], 1
    %760 = vsyncpa [#allocation8], 1

</llo_original>
